<compile_context>
chip_gen: v5e
topology: v5e:2x2
jax: 0.10.0
libtpu: 0.0.40
codegen_flags: <defaults>
</compile_context>

<pallas_src>
import numpy as np
import jax
import jax.numpy as jnp
from jax.experimental import pallas as pl
from jax.experimental.pallas import tpu as pltpu


# ---------------------------------------------------------------------------
# Kernel: batch-on-lanes 5-layer MLP.  Every activation is [features, N_tile].
# ---------------------------------------------------------------------------
def _mlp_kernel(x_ref,
                w1_ref, b1_ref,
                w2_ref, b2_ref,
                w3_ref, b3_ref,
                w4_ref, b4_ref,
                w5_ref, b5_ref,
                o_ref):
    d_in = x_ref.shape[0]                       # static (2)
    x = x_ref[...]                              # [D_in, Nt]
    w1 = w1_ref[...]                            # [H, D_in]

    # Layer 1: K = D_in (tiny) -> VPU FMAs instead of a K-padded MXU matmul.
    acc = w1[:, 0:1] * x[0:1, :]                # [H, Nt]
    for d in range(1, d_in):                    # static unroll
        acc = acc + w1[:, d:d + 1] * x[d:d + 1, :]
    h = jnp.tanh(acc + b1_ref[...])

    # Layers 2-4: [H, H] @ [H, Nt] on the MXU, f32 accumulation, tanh on EUP.
    h = jnp.tanh(jnp.dot(w2_ref[...], h,
                         preferred_element_type=jnp.float32) + b2_ref[...])
    h = jnp.tanh(jnp.dot(w3_ref[...], h,
                         preferred_element_type=jnp.float32) + b3_ref[...])
    h = jnp.tanh(jnp.dot(w4_ref[...], h,
                         preferred_element_type=jnp.float32) + b4_ref[...])

    # Final layer: no tanh.  Lane-dense output store.
    y = jnp.dot(w5_ref[...], h,
                preferred_element_type=jnp.float32) + b5_ref[...]  # [D_out, Nt]
    o_ref[...] = y.astype(o_ref.dtype)


# ---------------------------------------------------------------------------
# Wrapper factory: folds scale ONCE, returns a single jitted forward in which
# pad/transpose, pallas_call and slice/transpose all live in one XLA program.
# ---------------------------------------------------------------------------
def make_particular_forward(params, scale, *, target_steps=2, max_tile=2048):
    """params: torch-layout weights/biases:
         w1 [H, D_in], w2/w3/w4 [H, H], w5 [D_out, H]
         b1..b4 [H, 1], b5 [D_out, 1]
       scale: scalar (n * a1); folded into the params here, once.
    """
    # Fold s into every layer: tanh(s*(W h + b)) == tanh((s W) h + (s b)),
    # and the last (linear) layer scales the same way.  Done once, eagerly.
    s = jnp.float32(scale)
    p = {k: (jnp.asarray(v, jnp.float32) * s) for k, v in params.items()}

    d_in = p["w1"].shape[1]
    hidden = p["w1"].shape[0]
    d_out = p["w5"].shape[0]

    def _pick_tiling(n):
        lane = 128
        nblk = -(-n // lane)                      # ceil(N / 128) lane blocks
        steps = max(1, min(target_steps, nblk))
        blocks_per_step = -(-nblk // steps)
        n_tile = blocks_per_step * lane
        if n_tile > max_tile:                     # bound vreg live ranges
            n_tile = max_tile
            steps = -(-nblk * lane // n_tile)
        return n_tile, steps, n_tile * steps

    @jax.jit
    def forward(x):
        n = x.shape[0]
        n_tile, steps, n_pad = _pick_tiling(n)

        # Pad batch to n_pad and go batch-on-lanes: [D_in, n_pad].
        xt = jnp.pad(x, ((0, n_pad - n), (0, 0))).T

        def resident(shape):
            return pl.BlockSpec(shape, lambda i: (0, 0))

        in_specs = [
            pl.BlockSpec((d_in, n_tile), lambda i: (0, i)),   # x tile, per step
            resident((hidden, d_in)),  resident((hidden, 1)),
            resident((hidden, hidden)), resident((hidden, 1)),
            resident((hidden, hidden)), resident((hidden, 1)),
            resident((hidden, hidden)), resident((hidden, 1)),
            resident((d_out, hidden)),  resident((d_out, 1)),
        ]
        out_specs = pl.BlockSpec((d_out, n_tile), lambda i: (0, i))

        yt = pl.pallas_call(
            _mlp_kernel,
            out_shape=jax.ShapeDtypeStruct((d_out, n_pad), jnp.float32),
            grid=(steps,),
            in_specs=in_specs,
            out_specs=out_specs,
            compiler_params=pltpu.CompilerParams(
                dimension_semantics=("parallel",)),
        )(xt,
          p["w1"], p["b1"],
          p["w2"], p["b2"],
          p["w3"], p["b3"],
          p["w4"], p["b4"],
          p["w5"], p["b5"])

        # Back to the module's [N, D_out] layout, dropping batch padding
        # (padded columns carry tanh(b) garbage which is sliced off here).
        return yt[:, :n].T

    return forward


# ---------------------------------------------------------------------------
# Init mirroring the torch module's normal_ init (torch weight layout).
# ---------------------------------------------------------------------------
def init_params(key, d_in, hidden, d_out):
    ks = jax.random.split(key, 10)

    def nrm(k, shape, std):
        return (std * jax.random.normal(k, shape)).astype(jnp.float32)

    return {
        "w1": nrm(ks[0], (hidden, d_in), np.sqrt(2.0 / (d_in + hidden))),
        "b1": nrm(ks[1], (hidden, 1), 1.0),
        "w2": nrm(ks[2], (hidden, hidden), np.sqrt(2.0 / (hidden + hidden))),
        "b2": nrm(ks[3], (hidden, 1), 1.0),
        "w3": nrm(ks[4], (hidden, hidden), np.sqrt(2.0 / (hidden + hidden))),
        "b3": nrm(ks[5], (hidden, 1), 1.0),
        "w4": nrm(ks[6], (hidden, hidden), np.sqrt(2.0 / (hidden + hidden))),
        "b4": nrm(ks[7], (hidden, 1), 1.0),
        "w5": nrm(ks[8], (d_out, hidden), np.sqrt(2.0 / (hidden + d_out))),
        "b5": nrm(ks[9], (d_out, 1), 1.0),
    }


def reference_forward(x, params, s):
    """Pure-JAX reference with the exact math of the torch module."""
    h = jnp.tanh(s * (x @ params["w1"].T + params["b1"].T))
    h = jnp.tanh(s * (h @ params["w2"].T + params["b2"].T))
    h = jnp.tanh(s * (h @ params["w3"].T + params["b3"].T))
    h = jnp.tanh(s * (h @ params["w4"].T + params["b4"].T))
    return s * (h @ params["w5"].T + params["b5"].T)


if __name__ == "__main__":
    key = jax.random.PRNGKey(0)
    k_x, k_p = jax.random.split(key)

    # Shapes implied by the module: input is (n_test, 2) coordinates -> D_in = 2.
    N, D_in, H, D_out = 500, 2, 32, 1

    x = jax.random.normal(k_x, (N, D_in), dtype=jnp.float32)
    params = init_params(k_p, D_in, H, D_out)

    # a1 = 0.1, n = 1 / a1  =>  scale = n * a1 (numerically 1.0, kept symbolic)
    a1 = 0.1
    scale = (1.0 / a1) * a1

    # Build once: scale fold happens here (not per call); forward is one jit.
    particular_fwd = make_particular_forward(params, scale, target_steps=2)

    y = particular_fwd(x)            # N=500 -> pad 512, 2 grid steps of 256 lanes
    jax.block_until_ready(y)

    y_ref = reference_forward(x, params, float(scale))
    np.testing.assert_allclose(np.asarray(y), np.asarray(y_ref),
                               rtol=1e-5, atol=1e-5)

    print("KERNEL_OK")
</pallas_src>

<mosaic_0001>
module attributes {stable_mosaic.version = 11 : i64} {
  func.func @_mlp_kernel(%arg0: i32, %arg1: memref<2x256xf32, #tpu.memory_space<vmem>>, %arg2: memref<32x2xf32, #tpu.memory_space<vmem>>, %arg3: memref<32x1xf32, #tpu.memory_space<vmem>>, %arg4: memref<32x32xf32, #tpu.memory_space<vmem>>, %arg5: memref<32x1xf32, #tpu.memory_space<vmem>>, %arg6: memref<32x32xf32, #tpu.memory_space<vmem>>, %arg7: memref<32x1xf32, #tpu.memory_space<vmem>>, %arg8: memref<32x32xf32, #tpu.memory_space<vmem>>, %arg9: memref<32x1xf32, #tpu.memory_space<vmem>>, %arg10: memref<1x32xf32, #tpu.memory_space<vmem>>, %arg11: memref<1x1xf32, #tpu.memory_space<vmem>>, %arg12: memref<1x256xf32, #tpu.memory_space<vmem>>) attributes {dimension_semantics = [#tpu.dimension_semantics<parallel>], iteration_bounds = array<i64: 2>, scalar_prefetch = 0 : i64, scratch_operands = 0 : i64, tpu.core_type = #tpu.core_type<tc>, window_params = [{transform_indices = @transform_0, window_bounds = array<i64: 2, 256>}, {pipeline_mode = #tpu.pipeline_mode<synchronous>, transform_indices = @transform_1, window_bounds = array<i64: 32, 2>}, {pipeline_mode = #tpu.pipeline_mode<synchronous>, transform_indices = @transform_2, window_bounds = array<i64: 32, 1>}, {pipeline_mode = #tpu.pipeline_mode<synchronous>, transform_indices = @transform_3, window_bounds = array<i64: 32, 32>}, {pipeline_mode = #tpu.pipeline_mode<synchronous>, transform_indices = @transform_4, window_bounds = array<i64: 32, 1>}, {pipeline_mode = #tpu.pipeline_mode<synchronous>, transform_indices = @transform_5, window_bounds = array<i64: 32, 32>}, {pipeline_mode = #tpu.pipeline_mode<synchronous>, transform_indices = @transform_6, window_bounds = array<i64: 32, 1>}, {pipeline_mode = #tpu.pipeline_mode<synchronous>, transform_indices = @transform_7, window_bounds = array<i64: 32, 32>}, {pipeline_mode = #tpu.pipeline_mode<synchronous>, transform_indices = @transform_8, window_bounds = array<i64: 32, 1>}, {pipeline_mode = #tpu.pipeline_mode<synchronous>, transform_indices = @transform_9, window_bounds = array<i64: 1, 32>}, {pipeline_mode = #tpu.pipeline_mode<synchronous>, transform_indices = @transform_10, window_bounds = array<i64: 1, 1>}, {transform_indices = @transform_11, window_bounds = array<i64: 1, 256>}]} {
    %c0 = arith.constant 0 : index
    %c0_0 = arith.constant 0 : index
    %0 = vector.load %arg1[%c0, %c0_0] : memref<2x256xf32, #tpu.memory_space<vmem>>, vector<2x256xf32>
    %c0_1 = arith.constant 0 : index
    %c0_2 = arith.constant 0 : index
    %1 = vector.load %arg2[%c0_1, %c0_2] : memref<32x2xf32, #tpu.memory_space<vmem>>, vector<32x2xf32>
    %2 = vector.extract_strided_slice %1 {offsets = [0, 0], sizes = [32, 1], strides = [1, 1]} : vector<32x2xf32> to vector<32x1xf32>
    %3 = vector.extract_strided_slice %0 {offsets = [0, 0], sizes = [1, 256], strides = [1, 1]} : vector<2x256xf32> to vector<1x256xf32>
    %4 = vector.broadcast %2 : vector<32x1xf32> to vector<32x256xf32>
    %5 = vector.broadcast %3 : vector<1x256xf32> to vector<32x256xf32>
    %6 = arith.mulf %4, %5 : vector<32x256xf32>
    %7 = vector.extract_strided_slice %1 {offsets = [0, 1], sizes = [32, 1], strides = [1, 1]} : vector<32x2xf32> to vector<32x1xf32>
    %8 = vector.extract_strided_slice %0 {offsets = [1, 0], sizes = [1, 256], strides = [1, 1]} : vector<2x256xf32> to vector<1x256xf32>
    %9 = vector.broadcast %7 : vector<32x1xf32> to vector<32x256xf32>
    %10 = vector.broadcast %8 : vector<1x256xf32> to vector<32x256xf32>
    %11 = arith.mulf %9, %10 : vector<32x256xf32>
    %12 = arith.addf %6, %11 : vector<32x256xf32>
    %c0_3 = arith.constant 0 : index
    %c0_4 = arith.constant 0 : index
    %13 = vector.load %arg3[%c0_3, %c0_4] : memref<32x1xf32, #tpu.memory_space<vmem>>, vector<32x1xf32>
    %14 = vector.broadcast %13 : vector<32x1xf32> to vector<32x256xf32>
    %15 = arith.addf %12, %14 : vector<32x256xf32>
    %16 = math.tanh %15 : vector<32x256xf32>
    %c0_5 = arith.constant 0 : index
    %c0_6 = arith.constant 0 : index
    %17 = vector.load %arg4[%c0_5, %c0_6] : memref<32x32xf32, #tpu.memory_space<vmem>>, vector<32x32xf32>
    %cst = arith.constant dense<0.000000e+00> : vector<32x256xf32>
    %18 = tpu.matmul %17, %16, %cst {dimension_numbers = #tpu.dot_dimension_numbers<[1], [0], [0], [1], [0, 0, 1, 1], [], []>} : vector<32x32xf32>, vector<32x256xf32>, vector<32x256xf32> -> vector<32x256xf32>
    %c0_7 = arith.constant 0 : index
    %c0_8 = arith.constant 0 : index
    %19 = vector.load %arg5[%c0_7, %c0_8] : memref<32x1xf32, #tpu.memory_space<vmem>>, vector<32x1xf32>
    %20 = vector.broadcast %19 : vector<32x1xf32> to vector<32x256xf32>
    %21 = arith.addf %18, %20 : vector<32x256xf32>
    %22 = math.tanh %21 : vector<32x256xf32>
    %c0_9 = arith.constant 0 : index
    %c0_10 = arith.constant 0 : index
    %23 = vector.load %arg6[%c0_9, %c0_10] : memref<32x32xf32, #tpu.memory_space<vmem>>, vector<32x32xf32>
    %cst_11 = arith.constant dense<0.000000e+00> : vector<32x256xf32>
    %24 = tpu.matmul %23, %22, %cst_11 {dimension_numbers = #tpu.dot_dimension_numbers<[1], [0], [0], [1], [0, 0, 1, 1], [], []>} : vector<32x32xf32>, vector<32x256xf32>, vector<32x256xf32> -> vector<32x256xf32>
    %c0_12 = arith.constant 0 : index
    %c0_13 = arith.constant 0 : index
    %25 = vector.load %arg7[%c0_12, %c0_13] : memref<32x1xf32, #tpu.memory_space<vmem>>, vector<32x1xf32>
    %26 = vector.broadcast %25 : vector<32x1xf32> to vector<32x256xf32>
    %27 = arith.addf %24, %26 : vector<32x256xf32>
    %28 = math.tanh %27 : vector<32x256xf32>
    %c0_14 = arith.constant 0 : index
    %c0_15 = arith.constant 0 : index
    %29 = vector.load %arg8[%c0_14, %c0_15] : memref<32x32xf32, #tpu.memory_space<vmem>>, vector<32x32xf32>
    %cst_16 = arith.constant dense<0.000000e+00> : vector<32x256xf32>
    %30 = tpu.matmul %29, %28, %cst_16 {dimension_numbers = #tpu.dot_dimension_numbers<[1], [0], [0], [1], [0, 0, 1, 1], [], []>} : vector<32x32xf32>, vector<32x256xf32>, vector<32x256xf32> -> vector<32x256xf32>
    %c0_17 = arith.constant 0 : index
    %c0_18 = arith.constant 0 : index
    %31 = vector.load %arg9[%c0_17, %c0_18] : memref<32x1xf32, #tpu.memory_space<vmem>>, vector<32x1xf32>
    %32 = vector.broadcast %31 : vector<32x1xf32> to vector<32x256xf32>
    %33 = arith.addf %30, %32 : vector<32x256xf32>
    %34 = math.tanh %33 : vector<32x256xf32>
    %c0_19 = arith.constant 0 : index
    %c0_20 = arith.constant 0 : index
    %35 = vector.load %arg10[%c0_19, %c0_20] : memref<1x32xf32, #tpu.memory_space<vmem>>, vector<1x32xf32>
    %cst_21 = arith.constant dense<0.000000e+00> : vector<1x256xf32>
    %36 = tpu.matmul %35, %34, %cst_21 {dimension_numbers = #tpu.dot_dimension_numbers<[1], [0], [0], [1], [0, 0, 1, 1], [], []>} : vector<1x32xf32>, vector<32x256xf32>, vector<1x256xf32> -> vector<1x256xf32>
    %c0_22 = arith.constant 0 : index
    %c0_23 = arith.constant 0 : index
    %37 = vector.load %arg11[%c0_22, %c0_23] : memref<1x1xf32, #tpu.memory_space<vmem>>, vector<1x1xf32>
    %38 = vector.broadcast %37 : vector<1x1xf32> to vector<1x256xf32>
    %39 = arith.addf %36, %38 : vector<1x256xf32>
    %c0_24 = arith.constant 0 : index
    %c0_25 = arith.constant 0 : index
    %40 = vector.load %arg12[%c0_24, %c0_25] : memref<1x256xf32, #tpu.memory_space<vmem>>, vector<1x256xf32>
    tpu.vector_store %arg12[%c0_24, %c0_25], %39 {strides = array<i32>} : memref<1x256xf32, #tpu.memory_space<vmem>>, vector<1x256xf32>,
    return
  }
  func.func @transform_0(%arg0: i32) -> (i32, i32) {
    %c0_i32 = arith.constant 0 : i32
    %c0_i32_0 = arith.constant 0 : i32
    return %c0_i32, %arg0 : i32, i32
  }
  func.func @transform_1(%arg0: i32) -> (i32, i32) {
    %c0_i32 = arith.constant 0 : i32
    %c0_i32_0 = arith.constant 0 : i32
    %c0_i32_1 = arith.constant 0 : i32
    return %c0_i32, %c0_i32_0 : i32, i32
  }
  func.func @transform_2(%arg0: i32) -> (i32, i32) {
    %c0_i32 = arith.constant 0 : i32
    %c0_i32_0 = arith.constant 0 : i32
    %c0_i32_1 = arith.constant 0 : i32
    return %c0_i32, %c0_i32_0 : i32, i32
  }
  func.func @transform_3(%arg0: i32) -> (i32, i32) {
    %c0_i32 = arith.constant 0 : i32
    %c0_i32_0 = arith.constant 0 : i32
    %c0_i32_1 = arith.constant 0 : i32
    return %c0_i32, %c0_i32_0 : i32, i32
  }
  func.func @transform_4(%arg0: i32) -> (i32, i32) {
    %c0_i32 = arith.constant 0 : i32
    %c0_i32_0 = arith.constant 0 : i32
    %c0_i32_1 = arith.constant 0 : i32
    return %c0_i32, %c0_i32_0 : i32, i32
  }
  func.func @transform_5(%arg0: i32) -> (i32, i32) {
    %c0_i32 = arith.constant 0 : i32
    %c0_i32_0 = arith.constant 0 : i32
    %c0_i32_1 = arith.constant 0 : i32
    return %c0_i32, %c0_i32_0 : i32, i32
  }
  func.func @transform_6(%arg0: i32) -> (i32, i32) {
    %c0_i32 = arith.constant 0 : i32
    %c0_i32_0 = arith.constant 0 : i32
    %c0_i32_1 = arith.constant 0 : i32
    return %c0_i32, %c0_i32_0 : i32, i32
  }
  func.func @transform_7(%arg0: i32) -> (i32, i32) {
    %c0_i32 = arith.constant 0 : i32
    %c0_i32_0 = arith.constant 0 : i32
    %c0_i32_1 = arith.constant 0 : i32
    return %c0_i32, %c0_i32_0 : i32, i32
  }
  func.func @transform_8(%arg0: i32) -> (i32, i32) {
    %c0_i32 = arith.constant 0 : i32
    %c0_i32_0 = arith.constant 0 : i32
    %c0_i32_1 = arith.constant 0 : i32
    return %c0_i32, %c0_i32_0 : i32, i32
  }
  func.func @transform_9(%arg0: i32) -> (i32, i32) {
    %c0_i32 = arith.constant 0 : i32
    %c0_i32_0 = arith.constant 0 : i32
    %c0_i32_1 = arith.constant 0 : i32
    return %c0_i32, %c0_i32_0 : i32, i32
  }
  func.func @transform_10(%arg0: i32) -> (i32, i32) {
    %c0_i32 = arith.constant 0 : i32
    %c0_i32_0 = arith.constant 0 : i32
    %c0_i32_1 = arith.constant 0 : i32
    return %c0_i32, %c0_i32_0 : i32, i32
  }
  func.func @transform_11(%arg0: i32) -> (i32, i32) {
    %c0_i32 = arith.constant 0 : i32
    %c0_i32_0 = arith.constant 0 : i32
    return %c0_i32, %arg0 : i32, i32
  }
}

</mosaic_0001>

<llo_original>
// kernel: forward.1
$region0: #{forward.1}
  #allocation0 [shape = 'u32[]', space=smem, size = 0x4, offset = 0x4, fixed_abs, tag = 'smem constant byte address 0x4 - core index']
  #allocation1 [shape = 'u32[72,128]{1,0:T(1,128)}', space=vmem, size = 0x9000, scoped, tag = 'internal scratch']
  #allocation2 [shape = 'f32[1,1]{1,0:T(1,128)S(1)}', space=vmem, size = 0x200, scoped, tag = 'scoped memory for forward.1']
  %s0 = inlined_call_operand.vmem [shape: f32[2,512], index: 0, kind: input, shape index: {}]
  %s1 = inlined_call_operand.hbm [shape: f32[32,2], index: 1, kind: input, shape index: {}]
  %s2 = inlined_call_operand.hbm [shape: f32[32,1], index: 2, kind: input, shape index: {}]
  %s3 = inlined_call_operand.hbm [shape: f32[32,32], index: 3, kind: input, shape index: {}]
  %s4 = inlined_call_operand.hbm [shape: f32[32,1], index: 4, kind: input, shape index: {}]
  %s5 = inlined_call_operand.hbm [shape: f32[32,32], index: 5, kind: input, shape index: {}]
  %s6 = inlined_call_operand.hbm [shape: f32[32,1], index: 6, kind: input, shape index: {}]
  %s7 = inlined_call_operand.hbm [shape: f32[32,32], index: 7, kind: input, shape index: {}]
  %s8 = inlined_call_operand.hbm [shape: f32[32,1], index: 8, kind: input, shape index: {}]
  %s9 = inlined_call_operand.vmem [shape: f32[1,32], index: 9, kind: input, shape index: {}]
  %s10 = inlined_call_operand.<no memory space> [shape: f32[1,1], index: 10, kind: input, shape index: {}]
  %s11 = inlined_call_operand.vmem [shape: f32[1,512], index: 11, kind: output, shape index: {}]
  %s12 = sld [smem:[#allocation0]]
  $region109: #{forward.1} parent=0
    _
  %s14 = ssub.s32 1, %s12
  %s15 = scalar_select 0, %s14, %s12
  %v16 = vstv %s10
  %17 = vst [vmem:[#allocation2] sm:$0x1] %v16
  $region1: #{forward.1} parent=0
    #allocation3 [shape = 'u8[16384]{0}', space=vmem, size = 0x4000, scoped, tag = 'input window, operand 1, single buffered']
    #allocation4 [shape = 's32[2]{0}', space=sflag, size = 0x8, scoped, tag = 'scoped memory for forward.1']
    #allocation5 [shape = 'u8[16384]{0}', space=vmem, size = 0x4000, scoped, tag = 'input window, operand 2, single buffered']
    #allocation6 [shape = 's32[1]{0}', space=sflag, size = 0x4, scoped, tag = 'scoped memory for forward.1']
    #allocation7 [shape = 'u8[16384]{0}', space=vmem, size = 0x4000, scoped, tag = 'input window, operand 3, single buffered']
    #allocation8 [shape = 'u8[16384]{0}', space=vmem, size = 0x4000, scoped, tag = 'input window, operand 4, single buffered']
    #allocation9 [shape = 's32[1]{0}', space=sflag, size = 0x4, scoped, tag = 'scoped memory for forward.1']
    #allocation10 [shape = 'u8[16384]{0}', space=vmem, size = 0x4000, scoped, tag = 'input window, operand 5, single buffered']
    #allocation11 [shape = 'u8[16384]{0}', space=vmem, size = 0x4000, scoped, tag = 'input window, operand 6, single buffered']
    #allocation12 [shape = 's32[1]{0}', space=sflag, size = 0x4, scoped, tag = 'scoped memory for forward.1']
    #allocation13 [shape = 'u8[16384]{0}', space=vmem, size = 0x4000, scoped, tag = 'input window, operand 7, single buffered']
    #allocation14 [shape = 'u8[16384]{0}', space=vmem, size = 0x4000, scoped, tag = 'input window, operand 8, single buffered']
    #allocation15 [shape = 's32[1]{0}', space=sflag, size = 0x4, scoped, tag = 'scoped memory for forward.1']
    %18 = vsyncpa [#allocation4], 0
    %19 = vsyncpa [#allocation6], 0
    %20 = vsyncpa [#allocation9], 0
    %21 = vsyncpa [#allocation12], 0
    %22 = vsyncpa [#allocation15], 0
    loop: start=0, step=1, limit=4
    $region2: #{forward.1} parent=1 // loop_pre_header
      _
    $region3: #{forward.1} parent=1 // loop_header
      %s24 = sphi 0, %s28
      %p25 = scmp.ge.s32.totalorder %s24, 4
      %s34 = sphi 0, %s36
      %s37 = sphi 0, %s34
      %s38 = sphi 0, %s37
      %s54 = sphi 0, %s38
      %s58 = sphi 0, %s58
      %s60 = sphi 0, %s58
      %s61 = sphi 0, %s60
      %s75 = sphi 0, %s61
      %s79 = sphi 0, %s79
      %s81 = sphi 0, %s79
      %s82 = sphi 0, %s81
      %s96 = sphi 0, %s82
      %s100 = sphi 0, %s100
      %s102 = sphi 0, %s100
      %s103 = sphi 0, %s102
      %s117 = sphi 0, %s103
      %s121 = sphi 0, %s121
      %s123 = sphi 0, %s121
      %s124 = sphi 0, %s123
      %s138 = sphi 0, %s124
      %s142 = sphi 0, %s142
      %s144 = sphi 0, %s142
      %s145 = sphi 0, %s144
      %s159 = sphi 0, %s145
      %s163 = sphi 0, %s163
      %s165 = sphi 0, %s163
      %s166 = sphi 0, %s165
      %s180 = sphi 0, %s166
      %s184 = sphi 0, %s184
      %s186 = sphi 0, %s184
      %s187 = sphi 0, %s186
      %s201 = sphi 0, %s187
      %s205 = sphi 0, %s205
      %s207 = sphi 0, %s205
      %s208 = sphi 0, %s207
      %s222 = sphi 0, %s208
      %s226 = sphi 0, %s226
      %s228 = sphi 0, %s226
      %s229 = sphi 0, %s228
      %s243 = sphi 0, %s229
      %s247 = sphi 0, %s247
      %s249 = sphi 0, %s247
      %s250 = sphi 0, %s249
      %s264 = sphi 0, %s250
      %s270 = sphi 0, %s272
      %s273 = sphi 0, %s270
      %s274 = sphi 0, %s273
      %s290 = sphi 0, %s274
    $region4: #{forward.1} parent=1 // loop_header_branch
      %27 = sbr.rel (%p25) target = $region8
    $region5: #{forward.1} parent=1 // loop_body
      %s29 = ssub.s32 %s24, 1
      %s30 = ssub.s32 %s24, 2
      %s31 = sadd.s32 %s24, 1
      %s32 = ssub.s32 %s24, %s31
      %p33 = scmp.eq.s32.totalorder %s32, 0
      %s35 = sadd.s32 %s34, 1
      %s36 = scalar_select %p33, %s34, %s35
      %p39 = pneg %p33
      %p40 = scmp.eq.s32.totalorder %s24, 1
      %p41 = por %p39, %p40
      %p42 = scmp.ne.s32.totalorder %s34, %s37
      %p43 = scmp.eq.s32.totalorder %s24, 0
      %p44 = por %p42, %p43
      %p45 = scmp.ne.s32.totalorder %s34, %s37
      %p46 = scmp.eq.s32.totalorder %s29, 1
      %p47 = por %p45, %p46
      %p48 = scmp.ne.s32.totalorder %s37, %s38
      %p49 = scmp.eq.s32.totalorder %s29, 0
      %p50 = por %p48, %p49
      %p51 = scmp.ne.s32.totalorder %s37, %s38
      %p52 = scmp.eq.s32.totalorder %s30, 1
      %p53 = por %p51, %p52
      %p55 = scmp.ne.s32.totalorder %s38, %s54
      %p56 = scmp.eq.s32.totalorder %s30, 0
      %p57 = por %p55, %p56
      %s59 = sadd.s32 %s58, 1
      %p62 = scmp.eq.s32.totalorder %s24, 1
      %p63 = scmp.ne.s32.totalorder %s58, %s60
      %p64 = scmp.eq.s32.totalorder %s24, 0
      %p65 = por %p63, %p64
      %p66 = scmp.ne.s32.totalorder %s58, %s60
      %p67 = scmp.eq.s32.totalorder %s29, 1
      %p68 = por %p66, %p67
      %p69 = scmp.ne.s32.totalorder %s60, %s61
      %p70 = scmp.eq.s32.totalorder %s29, 0
      %p71 = por %p69, %p70
      %p72 = scmp.ne.s32.totalorder %s60, %s61
      %p73 = scmp.eq.s32.totalorder %s30, 1
      %p74 = por %p72, %p73
      %p76 = scmp.ne.s32.totalorder %s61, %s75
      %p77 = scmp.eq.s32.totalorder %s30, 0
      %p78 = por %p76, %p77
      %s80 = sadd.s32 %s79, 1
      %p83 = scmp.eq.s32.totalorder %s24, 1
      %p84 = scmp.ne.s32.totalorder %s79, %s81
      %p85 = scmp.eq.s32.totalorder %s24, 0
      %p86 = por %p84, %p85
      %p87 = scmp.ne.s32.totalorder %s79, %s81
      %p88 = scmp.eq.s32.totalorder %s29, 1
      %p89 = por %p87, %p88
      %p90 = scmp.ne.s32.totalorder %s81, %s82
      %p91 = scmp.eq.s32.totalorder %s29, 0
      %p92 = por %p90, %p91
      %p93 = scmp.ne.s32.totalorder %s81, %s82
      %p94 = scmp.eq.s32.totalorder %s30, 1
      %p95 = por %p93, %p94
      %p97 = scmp.ne.s32.totalorder %s82, %s96
      %p98 = scmp.eq.s32.totalorder %s30, 0
      %p99 = por %p97, %p98
      %s101 = sadd.s32 %s100, 1
      %p104 = scmp.eq.s32.totalorder %s24, 1
      %p105 = scmp.ne.s32.totalorder %s100, %s102
      %p106 = scmp.eq.s32.totalorder %s24, 0
      %p107 = por %p105, %p106
      %p108 = scmp.ne.s32.totalorder %s100, %s102
      %p109 = scmp.eq.s32.totalorder %s29, 1
      %p110 = por %p108, %p109
      %p111 = scmp.ne.s32.totalorder %s102, %s103
      %p112 = scmp.eq.s32.totalorder %s29, 0
      %p113 = por %p111, %p112
      %p114 = scmp.ne.s32.totalorder %s102, %s103
      %p115 = scmp.eq.s32.totalorder %s30, 1
      %p116 = por %p114, %p115
      %p118 = scmp.ne.s32.totalorder %s103, %s117
      %p119 = scmp.eq.s32.totalorder %s30, 0
      %p120 = por %p118, %p119
      %s122 = sadd.s32 %s121, 1
      %p125 = scmp.eq.s32.totalorder %s24, 1
      %p126 = scmp.ne.s32.totalorder %s121, %s123
      %p127 = scmp.eq.s32.totalorder %s24, 0
      %p128 = por %p126, %p127
      %p129 = scmp.ne.s32.totalorder %s121, %s123
      %p130 = scmp.eq.s32.totalorder %s29, 1
      %p131 = por %p129, %p130
      %p132 = scmp.ne.s32.totalorder %s123, %s124
      %p133 = scmp.eq.s32.totalorder %s29, 0
      %p134 = por %p132, %p133
      %p135 = scmp.ne.s32.totalorder %s123, %s124
      %p136 = scmp.eq.s32.totalorder %s30, 1
      %p137 = por %p135, %p136
      %p139 = scmp.ne.s32.totalorder %s124, %s138
      %p140 = scmp.eq.s32.totalorder %s30, 0
      %p141 = por %p139, %p140
      %s143 = sadd.s32 %s142, 1
      %p146 = scmp.eq.s32.totalorder %s24, 1
      %p147 = scmp.ne.s32.totalorder %s142, %s144
      %p148 = scmp.eq.s32.totalorder %s24, 0
      %p149 = por %p147, %p148
      %p150 = scmp.ne.s32.totalorder %s142, %s144
      %p151 = scmp.eq.s32.totalorder %s29, 1
      %p152 = por %p150, %p151
      %p153 = scmp.ne.s32.totalorder %s144, %s145
      %p154 = scmp.eq.s32.totalorder %s29, 0
      %p155 = por %p153, %p154
      %p156 = scmp.ne.s32.totalorder %s144, %s145
      %p157 = scmp.eq.s32.totalorder %s30, 1
      %p158 = por %p156, %p157
      %p160 = scmp.ne.s32.totalorder %s145, %s159
      %p161 = scmp.eq.s32.totalorder %s30, 0
      %p162 = por %p160, %p161
      %s164 = sadd.s32 %s163, 1
      %p167 = scmp.eq.s32.totalorder %s24, 1
      %p168 = scmp.ne.s32.totalorder %s163, %s165
      %p169 = scmp.eq.s32.totalorder %s24, 0
      %p170 = por %p168, %p169
      %p171 = scmp.ne.s32.totalorder %s163, %s165
      %p172 = scmp.eq.s32.totalorder %s29, 1
      %p173 = por %p171, %p172
      %p174 = scmp.ne.s32.totalorder %s165, %s166
      %p175 = scmp.eq.s32.totalorder %s29, 0
      %p176 = por %p174, %p175
      %p177 = scmp.ne.s32.totalorder %s165, %s166
      %p178 = scmp.eq.s32.totalorder %s30, 1
      %p179 = por %p177, %p178
      %p181 = scmp.ne.s32.totalorder %s166, %s180
      %p182 = scmp.eq.s32.totalorder %s30, 0
      %p183 = por %p181, %p182
      %s185 = sadd.s32 %s184, 1
      %p188 = scmp.eq.s32.totalorder %s24, 1
      %p189 = scmp.ne.s32.totalorder %s184, %s186
      %p190 = scmp.eq.s32.totalorder %s24, 0
      %p191 = por %p189, %p190
      %p192 = scmp.ne.s32.totalorder %s184, %s186
      %p193 = scmp.eq.s32.totalorder %s29, 1
      %p194 = por %p192, %p193
      %p195 = scmp.ne.s32.totalorder %s186, %s187
      %p196 = scmp.eq.s32.totalorder %s29, 0
      %p197 = por %p195, %p196
      %p198 = scmp.ne.s32.totalorder %s186, %s187
      %p199 = scmp.eq.s32.totalorder %s30, 1
      %p200 = por %p198, %p199
      %p202 = scmp.ne.s32.totalorder %s187, %s201
      %p203 = scmp.eq.s32.totalorder %s30, 0
      %p204 = por %p202, %p203
      %s206 = sadd.s32 %s205, 1
      %p209 = scmp.eq.s32.totalorder %s24, 1
      %p210 = scmp.ne.s32.totalorder %s205, %s207
      %p211 = scmp.eq.s32.totalorder %s24, 0
      %p212 = por %p210, %p211
      %p213 = scmp.ne.s32.totalorder %s205, %s207
      %p214 = scmp.eq.s32.totalorder %s29, 1
      %p215 = por %p213, %p214
      %p216 = scmp.ne.s32.totalorder %s207, %s208
      %p217 = scmp.eq.s32.totalorder %s29, 0
      %p218 = por %p216, %p217
      %p219 = scmp.ne.s32.totalorder %s207, %s208
      %p220 = scmp.eq.s32.totalorder %s30, 1
      %p221 = por %p219, %p220
      %p223 = scmp.ne.s32.totalorder %s208, %s222
      %p224 = scmp.eq.s32.totalorder %s30, 0
      %p225 = por %p223, %p224
      %s227 = sadd.s32 %s226, 1
      %p230 = scmp.eq.s32.totalorder %s24, 1
      %p231 = scmp.ne.s32.totalorder %s226, %s228
      %p232 = scmp.eq.s32.totalorder %s24, 0
      %p233 = por %p231, %p232
      %p234 = scmp.ne.s32.totalorder %s226, %s228
      %p235 = scmp.eq.s32.totalorder %s29, 1
      %p236 = por %p234, %p235
      %p237 = scmp.ne.s32.totalorder %s228, %s229
      %p238 = scmp.eq.s32.totalorder %s29, 0
      %p239 = por %p237, %p238
      %p240 = scmp.ne.s32.totalorder %s228, %s229
      %p241 = scmp.eq.s32.totalorder %s30, 1
      %p242 = por %p240, %p241
      %p244 = scmp.ne.s32.totalorder %s229, %s243
      %p245 = scmp.eq.s32.totalorder %s30, 0
      %p246 = por %p244, %p245
      %s248 = sadd.s32 %s247, 1
      %p251 = scmp.eq.s32.totalorder %s24, 1
      %p252 = scmp.ne.s32.totalorder %s247, %s249
      %p253 = scmp.eq.s32.totalorder %s24, 0
      %p254 = por %p252, %p253
      %p255 = scmp.ne.s32.totalorder %s247, %s249
      %p256 = scmp.eq.s32.totalorder %s29, 1
      %p257 = por %p255, %p256
      %p258 = scmp.ne.s32.totalorder %s249, %s250
      %p259 = scmp.eq.s32.totalorder %s29, 0
      %p260 = por %p258, %p259
      %p261 = scmp.ne.s32.totalorder %s249, %s250
      %p262 = scmp.eq.s32.totalorder %s30, 1
      %p263 = por %p261, %p262
      %p265 = scmp.ne.s32.totalorder %s250, %s264
      %p266 = scmp.eq.s32.totalorder %s30, 0
      %p267 = por %p265, %p266
      %s268 = ssub.s32 %s24, %s31
      %p269 = scmp.eq.s32.totalorder %s268, 0
      %s271 = sadd.s32 %s270, 1
      %s272 = scalar_select %p269, %s270, %s271
      %p275 = pneg %p269
      %p276 = scmp.eq.s32.totalorder %s24, 1
      %p277 = por %p275, %p276
      %p278 = scmp.ne.s32.totalorder %s270, %s273
      %p279 = scmp.eq.s32.totalorder %s24, 0
      %p280 = por %p278, %p279
      %p281 = scmp.ne.s32.totalorder %s270, %s273
      %p282 = scmp.eq.s32.totalorder %s29, 1
      %p283 = por %p281, %p282
      %p284 = scmp.ne.s32.totalorder %s273, %s274
      %p285 = scmp.eq.s32.totalorder %s29, 0
      %p286 = por %p284, %p285
      %p287 = scmp.ne.s32.totalorder %s273, %s274
      %p288 = scmp.eq.s32.totalorder %s30, 1
      %p289 = por %p287, %p288
      %p291 = scmp.ne.s32.totalorder %s274, %s290
      %p292 = scmp.eq.s32.totalorder %s30, 0
      %p293 = por %p291, %p292
      %p294 = scmp.le.s32.totalorder 1, %s24
      %p295 = scmp.lt.s32.totalorder %s24, 3
      %p296 = pnand %p294, %p295
      %p297 = pneg %p296
      // Predicated region
      $region9: #{forward.1} parent=5 // pred_check
        _
      $region10: #{forward.1} parent=5 // pred_check_branch
        %299 = sbr.rel (%p296) target = $region12
      $region11: #{forward.1} parent=5 // pred_region
        %s300 = ssub.s32 %s24, 1
        // Predicated region
        $region13: #{forward.1} parent=11 // pred_check
          %p301 = pneg %p71
        $region14: #{forward.1} parent=11 // pred_check_branch
          %303 = sbr.rel (%p301) target = $region16
        $region15: #{forward.1} parent=11 // pred_region
          %305 = vsyncadd [#allocation4], 0
          %s306 = sshll.u32 %s1, 4
          %s307 = int_to_ptr.hbm [resolvable:$true] %s306
          %s308 = sshll.u32 [#allocation3], 4
          %s309 = int_to_ptr.vmem [resolvable:$true] %s308
          %314 = dma.hbm_to_vmem [thread:$0]  %s307, 512, %s309, [#allocation4], 128, 128, 8
        $region16: #{forward.1} parent=11 // pred_fallthru
          _
        // Predicated region
        $region17: #{forward.1} parent=11 // pred_check
          %p315 = pneg %p92
        $region18: #{forward.1} parent=11 // pred_check_branch
          %317 = sbr.rel (%p315) target = $region20
        $region19: #{forward.1} parent=11 // pred_region
          %319 = vsyncadd [#allocation6], 0
          %s320 = sshll.u32 %s2, 4
          %s321 = int_to_ptr.hbm [resolvable:$true] %s320
          %s322 = sshll.u32 [#allocation5], 4
          %s323 = int_to_ptr.vmem [resolvable:$true] %s322
          %328 = dma.hbm_to_vmem [thread:$0]  %s321, 512, %s323, [#allocation6], 128, 128, 8
        $region20: #{forward.1} parent=11 // pred_fallthru
          _
        // Predicated region
        $region21: #{forward.1} parent=11 // pred_check
          %p329 = pneg %p113
        $region22: #{forward.1} parent=11 // pred_check_branch
          %331 = sbr.rel (%p329) target = $region24
        $region23: #{forward.1} parent=11 // pred_region
          %333 = vsyncadd [#allocation6], 0
          %s334 = sshll.u32 %s3, 4
          %s335 = int_to_ptr.hbm [resolvable:$true] %s334
          %s336 = sshll.u32 [#allocation7], 4
          %s337 = int_to_ptr.vmem [resolvable:$true] %s336
          %342 = dma.hbm_to_vmem [thread:$0]  %s335, 512, %s337, [#allocation6], 128, 128, 8
        $region24: #{forward.1} parent=11 // pred_fallthru
          _
        // Predicated region
        $region25: #{forward.1} parent=11 // pred_check
          %p343 = pneg %p134
        $region26: #{forward.1} parent=11 // pred_check_branch
          %345 = sbr.rel (%p343) target = $region28
        $region27: #{forward.1} parent=11 // pred_region
          %347 = vsyncadd [#allocation9], 0
          %s348 = sshll.u32 %s4, 4
          %s349 = int_to_ptr.hbm [resolvable:$true] %s348
          %s350 = sshll.u32 [#allocation8], 4
          %s351 = int_to_ptr.vmem [resolvable:$true] %s350
          %356 = dma.hbm_to_vmem [thread:$0]  %s349, 512, %s351, [#allocation9], 128, 128, 8
        $region28: #{forward.1} parent=11 // pred_fallthru
          _
        // Predicated region
        $region29: #{forward.1} parent=11 // pred_check
          %p357 = pneg %p155
        $region30: #{forward.1} parent=11 // pred_check_branch
          %359 = sbr.rel (%p357) target = $region32
        $region31: #{forward.1} parent=11 // pred_region
          %361 = vsyncadd [#allocation9], 0
          %s362 = sshll.u32 %s5, 4
          %s363 = int_to_ptr.hbm [resolvable:$true] %s362
          %s364 = sshll.u32 [#allocation10], 4
          %s365 = int_to_ptr.vmem [resolvable:$true] %s364
          %370 = dma.hbm_to_vmem [thread:$0]  %s363, 512, %s365, [#allocation9], 128, 128, 8
        $region32: #{forward.1} parent=11 // pred_fallthru
          _
        // Predicated region
        $region33: #{forward.1} parent=11 // pred_check
          %p371 = pneg %p176
        $region34: #{forward.1} parent=11 // pred_check_branch
          %373 = sbr.rel (%p371) target = $region36
        $region35: #{forward.1} parent=11 // pred_region
          %375 = vsyncadd [#allocation12], 0
          %s376 = sshll.u32 %s6, 4
          %s377 = int_to_ptr.hbm [resolvable:$true] %s376
          %s378 = sshll.u32 [#allocation11], 4
          %s379 = int_to_ptr.vmem [resolvable:$true] %s378
          %384 = dma.hbm_to_vmem [thread:$0]  %s377, 512, %s379, [#allocation12], 128, 128, 8
        $region36: #{forward.1} parent=11 // pred_fallthru
          _
        // Predicated region
        $region37: #{forward.1} parent=11 // pred_check
          %p385 = pneg %p197
        $region38: #{forward.1} parent=11 // pred_check_branch
          %387 = sbr.rel (%p385) target = $region40
        $region39: #{forward.1} parent=11 // pred_region
          %389 = vsyncadd [#allocation12], 0
          %s390 = sshll.u32 %s7, 4
          %s391 = int_to_ptr.hbm [resolvable:$true] %s390
          %s392 = sshll.u32 [#allocation13], 4
          %s393 = int_to_ptr.vmem [resolvable:$true] %s392
          %398 = dma.hbm_to_vmem [thread:$0]  %s391, 512, %s393, [#allocation12], 128, 128, 8
        $region40: #{forward.1} parent=11 // pred_fallthru
          _
        // Predicated region
        $region41: #{forward.1} parent=11 // pred_check
          %p399 = pneg %p218
        $region42: #{forward.1} parent=11 // pred_check_branch
          %401 = sbr.rel (%p399) target = $region44
        $region43: #{forward.1} parent=11 // pred_region
          %403 = vsyncadd [#allocation15], 0
          %s404 = sshll.u32 %s8, 4
          %s405 = int_to_ptr.hbm [resolvable:$true] %s404
          %s406 = sshll.u32 [#allocation14], 4
          %s407 = int_to_ptr.vmem [resolvable:$true] %s406
          %412 = dma.hbm_to_vmem [thread:$0]  %s405, 512, %s407, [#allocation15], 128, 128, 8
        $region44: #{forward.1} parent=11 // pred_fallthru
          _
        // Predicated region
        $region45: #{forward.1} parent=11 // pred_check
          %p413 = pneg %p239
        $region46: #{forward.1} parent=11 // pred_check_branch
          %415 = sbr.rel (%p413) target = $region48
        $region47: #{forward.1} parent=11 // pred_region
          _
        $region48: #{forward.1} parent=11 // pred_fallthru
          _
        // Predicated region
        $region49: #{forward.1} parent=11 // pred_check
          %p416 = pneg %p260
        $region50: #{forward.1} parent=11 // pred_check_branch
          %418 = sbr.rel (%p416) target = $region52
        $region51: #{forward.1} parent=11 // pred_region
          _
        $region52: #{forward.1} parent=11 // pred_fallthru
          _
      $region12: #{forward.1} parent=5 // pred_fallthru
        _
      %p419 = scmp.lt.s32.totalorder %s24, 2
      // Predicated region
      $region53: #{forward.1} parent=5 // pred_check
        %p420 = pneg %p419
      $region54: #{forward.1} parent=5 // pred_check_branch
        %422 = sbr.rel (%p420) target = $region56
      $region55: #{forward.1} parent=5 // pred_region
        // Predicated region
        $region57: #{forward.1} parent=55 // pred_check
          %p423 = pneg %p44
        $region58: #{forward.1} parent=55 // pred_check_branch
          %425 = sbr.rel (%p423) target = $region60
        $region59: #{forward.1} parent=55 // pred_region
          %s426 = smul.u32 2, %s24
          %p427 = scmp.lt.s32.totalorder %s426, 3
          %s428 = scalar_select %p427, %s426, 3
          %s429 = smul.addr %s428, 2
          %s430 = scalar_lea.vmem %s0, %s429
          %s431 = smul.u32 2, %s24
        $region60: #{forward.1} parent=55 // pred_fallthru
          _
      $region56: #{forward.1} parent=5 // pred_fallthru
        _
      %p432 = scmp.le.s32.totalorder 1, %s24
      %p433 = scmp.lt.s32.totalorder %s24, 3
      %p434 = pnand %p432, %p433
      %p435 = pneg %p434
      // Predicated region
      $region61: #{forward.1} parent=5 // pred_check
        _
      $region62: #{forward.1} parent=5 // pred_check_branch
        %437 = sbr.rel (%p434) target = $region64
      $region63: #{forward.1} parent=5 // pred_region
        %s438 = ssub.s32 %s24, 1
        // Predicated region
        $region65: #{forward.1} parent=63 // pred_check
          %p439 = pneg %p71
        $region66: #{forward.1} parent=63 // pred_check_branch
          %441 = sbr.rel (%p439) target = $region68
        $region67: #{forward.1} parent=63 // pred_region
          %443 = dma.done [#allocation4], 512
        $region68: #{forward.1} parent=63 // pred_fallthru
          _
        // Predicated region
        $region69: #{forward.1} parent=63 // pred_check
          %p444 = pneg %p92
        $region70: #{forward.1} parent=63 // pred_check_branch
          %446 = sbr.rel (%p444) target = $region72
        $region71: #{forward.1} parent=63 // pred_region
          %448 = dma.done [#allocation6], 512
        $region72: #{forward.1} parent=63 // pred_fallthru
          _
        // Predicated region
        $region73: #{forward.1} parent=63 // pred_check
          %p449 = pneg %p113
        $region74: #{forward.1} parent=63 // pred_check_branch
          %451 = sbr.rel (%p449) target = $region76
        $region75: #{forward.1} parent=63 // pred_region
          %453 = dma.done [#allocation6], 512
        $region76: #{forward.1} parent=63 // pred_fallthru
          _
        // Predicated region
        $region77: #{forward.1} parent=63 // pred_check
          %p454 = pneg %p134
        $region78: #{forward.1} parent=63 // pred_check_branch
          %456 = sbr.rel (%p454) target = $region80
        $region79: #{forward.1} parent=63 // pred_region
          %458 = dma.done [#allocation9], 512
        $region80: #{forward.1} parent=63 // pred_fallthru
          _
        // Predicated region
        $region81: #{forward.1} parent=63 // pred_check
          %p459 = pneg %p155
        $region82: #{forward.1} parent=63 // pred_check_branch
          %461 = sbr.rel (%p459) target = $region84
        $region83: #{forward.1} parent=63 // pred_region
          %463 = dma.done [#allocation9], 512
        $region84: #{forward.1} parent=63 // pred_fallthru
          _
        // Predicated region
        $region85: #{forward.1} parent=63 // pred_check
          %p464 = pneg %p176
        $region86: #{forward.1} parent=63 // pred_check_branch
          %466 = sbr.rel (%p464) target = $region88
        $region87: #{forward.1} parent=63 // pred_region
          %468 = dma.done [#allocation12], 512
        $region88: #{forward.1} parent=63 // pred_fallthru
          _
        // Predicated region
        $region89: #{forward.1} parent=63 // pred_check
          %p469 = pneg %p197
        $region90: #{forward.1} parent=63 // pred_check_branch
          %471 = sbr.rel (%p469) target = $region92
        $region91: #{forward.1} parent=63 // pred_region
          %473 = dma.done [#allocation12], 512
        $region92: #{forward.1} parent=63 // pred_fallthru
          _
        // Predicated region
        $region93: #{forward.1} parent=63 // pred_check
          %p474 = pneg %p218
        $region94: #{forward.1} parent=63 // pred_check_branch
          %476 = sbr.rel (%p474) target = $region96
        $region95: #{forward.1} parent=63 // pred_region
          %478 = dma.done [#allocation15], 512
        $region96: #{forward.1} parent=63 // pred_fallthru
          _
        %s479 = smul.u32 2, %s29
        %p480 = scmp.lt.s32.totalorder %s479, 3
        %s481 = scalar_select %p480, %s479, 3
        %s482 = smul.addr %s481, 2
        %s483 = scalar_lea.vmem %s0, %s482
        %p484 = pneg %p50
        %p485 = pneg %p47
        %p486 = pneg %p71
        %p487 = pneg %p68
        %p488 = pneg %p92
        %p489 = pneg %p89
        %p490 = pneg %p113
        %p491 = pneg %p110
        %p492 = pneg %p134
        %p493 = pneg %p131
        %p494 = pneg %p155
        %p495 = pneg %p152
        %p496 = pneg %p176
        %p497 = pneg %p173
        %p498 = pneg %p197
        %p499 = pneg %p194
        %p500 = pneg %p218
        %p501 = pneg %p215
        %p502 = pneg %p239
        %p503 = pneg %p236
        %p504 = pneg %p260
        %p505 = pneg %p257
        %p506 = pneg %p286
        %p507 = pneg %p283
        %s508 = smul.u32 2, %s29
        %p509 = scmp.lt.s32.totalorder %s508, 3
        %s510 = scalar_select %p509, %s508, 3
        %s511 = scalar_lea.vmem %s11, %s510
        %s512 = smul.u32 2, %s29
        %p513 = scmp.lt.s32.totalorder %s512, 3
        %s514 = scalar_select %p513, %s512, 3
        %s515 = smul.addr %s514, 2
        %s516 = scalar_lea.vmem %s0, %s515
        %s517 = smul.u32 2, %s29
        %s518 = smul.u32 2, %s29
        %p519 = scmp.lt.s32.totalorder %s518, 3
        %s520 = scalar_select %p519, %s518, 3
        %s521 = scalar_lea.vmem %s11, %s520
        %s522 = smul.u32 2, %s29
        %v523 = vld [vmem:[%s516] sm:$0xf]
        %v524 = vld [vmem:[#allocation3] sm:$0xff]
        %v525 = vld [vmem:[#allocation3 + $0x8] sm:$0xff]
        %v526 = vld [vmem:[#allocation3 + $0x10] sm:$0xff]
        %v527 = vld [vmem:[#allocation3 + $0x18] sm:$0xff]
        %529 = vset.pattern.permute.xlu0 0
        %530 = vperm.xlu0 %529, %v524
        %v531 = vpop.permute.xlu0 %530
        %534 = vset.pattern.permute.xlu0 0
        %535 = vperm.xlu0 %534, %v525
        %v536 = vpop.permute.xlu0 %535
        %539 = vset.pattern.permute.xlu0 0
        %540 = vperm.xlu0 %539, %v526
        %v541 = vpop.permute.xlu0 %540
        %544 = vset.pattern.permute.xlu0 0
        %545 = vperm.xlu0 %544, %v527
        %v546 = vpop.permute.xlu0 %545
        %v549 = vperm.slane %v523, 0
        %v550 = vperm.slane %v523, 2
        %v553 = vperm.slane %v549, 0
        %v554 = vperm.slane %v550, 0
        %v555 = vmul.f32 %v531, %v553
        %v556 = vmul.f32 %v531, %v554
        %v557 = vmul.f32 %v536, %v553
        %v558 = vmul.f32 %v536, %v554
        %v559 = vmul.f32 %v541, %v553
        %v560 = vmul.f32 %v541, %v554
        %v561 = vmul.f32 %v546, %v553
        %v562 = vmul.f32 %v546, %v554
        %563 = vset.pattern.permute.xlu0 1
        %564 = vperm.xlu0 %563, %v524
        %v565 = vpop.permute.xlu0 %564
        %567 = vset.pattern.permute.xlu0 1
        %568 = vperm.xlu0 %567, %v525
        %v569 = vpop.permute.xlu0 %568
        %571 = vset.pattern.permute.xlu0 1
        %572 = vperm.xlu0 %571, %v526
        %v573 = vpop.permute.xlu0 %572
        %575 = vset.pattern.permute.xlu0 1
        %576 = vperm.xlu0 %575, %v527
        %v577 = vpop.permute.xlu0 %576
        %v579 = vperm.slane %v523, 1
        %v580 = vperm.slane %v523, 3
        %v583 = vperm.slane %v579, 1
        %v584 = vperm.slane %v580, 1
        %v585 = vmul.f32 %v565, %v583
        %v586 = vmul.f32 %v565, %v584
        %v587 = vmul.f32 %v569, %v583
        %v588 = vmul.f32 %v569, %v584
        %v589 = vmul.f32 %v573, %v583
        %v590 = vmul.f32 %v573, %v584
        %v591 = vmul.f32 %v577, %v583
        %v592 = vmul.f32 %v577, %v584
        %v593 = vadd.f32 %v555, %v585
        %v594 = vadd.f32 %v556, %v586
        %v595 = vadd.f32 %v557, %v587
        %v596 = vadd.f32 %v558, %v588
        %v597 = vadd.f32 %v559, %v589
        %v598 = vadd.f32 %v560, %v590
        %v599 = vadd.f32 %v561, %v591
        %v600 = vadd.f32 %v562, %v592
        %v601 = vld [vmem:[#allocation5] sm:$0xff]
        %v602 = vld [vmem:[#allocation5 + $0x8] sm:$0xff]
        %v603 = vld [vmem:[#allocation5 + $0x10] sm:$0xff]
        %v604 = vld [vmem:[#allocation5 + $0x18] sm:$0xff]
        %606 = vset.pattern.permute.xlu0 0
        %607 = vperm.xlu0 %606, %v601
        %v608 = vpop.permute.xlu0 %607
        %611 = vset.pattern.permute.xlu0 0
        %612 = vperm.xlu0 %611, %v602
        %v613 = vpop.permute.xlu0 %612
        %616 = vset.pattern.permute.xlu0 0
        %617 = vperm.xlu0 %616, %v603
        %v618 = vpop.permute.xlu0 %617
        %621 = vset.pattern.permute.xlu0 0
        %622 = vperm.xlu0 %621, %v604
        %v623 = vpop.permute.xlu0 %622
        %v625 = vadd.f32 %v593, %v608
        %v626 = vadd.f32 %v594, %v608
        %v627 = vadd.f32 %v595, %v613
        %v628 = vadd.f32 %v596, %v613
        %v629 = vadd.f32 %v597, %v618
        %v630 = vadd.f32 %v598, %v618
        %v631 = vadd.f32 %v599, %v623
        %v632 = vadd.f32 %v600, %v623
        %v633 = vtanh.pop %v625
        %v634 = vtanh.pop %v626
        %v635 = vtanh.pop %v627
        %v636 = vtanh.pop %v628
        %v637 = vtanh.pop %v629
        %v638 = vtanh.pop %v630
        %v639 = vtanh.pop %v631
        %v640 = vtanh.pop %v632
        %v641 = vld [vmem:[#allocation7] sm:$0xff]
        %v642 = vld [vmem:[#allocation7 + $0x8] sm:$0xff]
        %v643 = vld [vmem:[#allocation7 + $0x10] sm:$0xff]
        %v644 = vld [vmem:[#allocation7 + $0x18] sm:$0xff]
        %v645 = vld [vmem:[#allocation8] sm:$0xff]
        %v646 = vld [vmem:[#allocation8 + $0x8] sm:$0xff]
        %v647 = vld [vmem:[#allocation8 + $0x10] sm:$0xff]
        %v648 = vld [vmem:[#allocation8 + $0x18] sm:$0xff]
        %650 = vset.pattern.permute.xlu0 0
        %651 = vperm.xlu0 %650, %v645
        %v652 = vpop.permute.xlu0 %651
        %655 = vset.pattern.permute.xlu0 0
        %656 = vperm.xlu0 %655, %v646
        %v657 = vpop.permute.xlu0 %656
        %660 = vset.pattern.permute.xlu0 0
        %661 = vperm.xlu0 %660, %v647
        %v662 = vpop.permute.xlu0 %661
        %665 = vset.pattern.permute.xlu0 0
        %666 = vperm.xlu0 %665, %v648
        %v667 = vpop.permute.xlu0 %666
        %vm669 = vcmask 261120
        %v671 = vsel %vm669, %v641, 0
        %v674 = vsel %vm669, %v642, 0
        %v677 = vsel %vm669, %v643, 0
        %v680 = vsel %vm669, %v644, 0
        %682 = vmatpush.msra.mxu0 0.0
        %683 = vmatpush.msra.mxu0 0.0
        %684 = vmatpush.msra.mxu0 0.0
        %685 = vmatpush.msra.mxu0 0.0
        %686 = vmatpush.msra.mxu0 0.0
        %687 = vmatpush.msra.mxu0 0.0
        %688 = vmatpush.msra.mxu0 0.0
        %689 = vmatpush.msra.mxu0 0.0
        %690 = vmatpush.msra.mxu0 0.0
        %691 = vmatpush.msra.mxu0 0.0
        %692 = vmatpush.msra.mxu0 0.0
        %693 = vmatpush.msra.mxu0 0.0
        %694 = vmatpush.msra.mxu0 %v639
        %695 = vmatpush.msra.mxu0 %v637
        %696 = vmatpush.msra.mxu0 %v635
        %697 = vmatpush.msra.mxu0 %v633
        %698 = vmatmul.f32.gmra.mxu0 %v671
        %v699 = vpop.f32.mrf.mxu0
        %v700 = vadd.f32 %v652, %v699
        %701 = vmatmul.f32.gmra.mxu0 %v674
        %v702 = vpop.f32.mrf.mxu0
        %v703 = vadd.f32 %v657, %v702
        %704 = vmatmul.f32.gmra.mxu0 %v677
        %v705 = vpop.f32.mrf.mxu0
        %v706 = vadd.f32 %v662, %v705
        %707 = vmatmul.f32.gmra.mxu0 %v680
        %v708 = vpop.f32.mrf.mxu0
        %v709 = vadd.f32 %v667, %v708
        %710 = vdwg.mxu0
        %711 = vmatpush.msra.mxu0 0.0
        %712 = vmatpush.msra.mxu0 0.0
        %713 = vmatpush.msra.mxu0 0.0
        %714 = vmatpush.msra.mxu0 0.0
        %715 = vmatpush.msra.mxu0 0.0
        %716 = vmatpush.msra.mxu0 0.0
        %717 = vmatpush.msra.mxu0 0.0
        %718 = vmatpush.msra.mxu0 0.0
        %719 = vmatpush.msra.mxu0 0.0
        %720 = vmatpush.msra.mxu0 0.0
        %721 = vmatpush.msra.mxu0 0.0
        %722 = vmatpush.msra.mxu0 0.0
        %723 = vmatpush.msra.mxu0 %v640
        %724 = vmatpush.msra.mxu0 %v638
        %725 = vmatpush.msra.mxu0 %v636
        %726 = vmatpush.msra.mxu0 %v634
        %727 = vmatmul.f32.gmra.mxu0 %v671
        %v728 = vpop.f32.mrf.mxu0
        %v729 = vadd.f32 %v652, %v728
        %730 = vmatmul.f32.gmra.mxu0 %v674
        %v731 = vpop.f32.mrf.mxu0
        %v732 = vadd.f32 %v657, %v731
        %733 = vmatmul.f32.gmra.mxu0 %v677
        %v734 = vpop.f32.mrf.mxu0
        %v735 = vadd.f32 %v662, %v734
        %736 = vmatmul.f32.gmra.mxu0 %v680
        %v737 = vpop.f32.mrf.mxu0
        %v738 = vadd.f32 %v667, %v737
        %739 = vdwg.mxu0
        %v740 = vtanh.pop %v700
        %v741 = vtanh.pop %v729
        %v742 = vtanh.pop %v703
        %v743 = vtanh.pop %v732
        %v744 = vtanh.pop %v706
        %v745 = vtanh.pop %v735
        %v746 = vtanh.pop %v709
        %v747 = vtanh.pop %v738
        %v748 = vld [vmem:[#allocation10] sm:$0xff]
        %v749 = vld [vmem:[#allocation10 + $0x8] sm:$0xff]
        %v750 = vld [vmem:[#allocation10 + $0x10] sm:$0xff]
        %v751 = vld [vmem:[#allocation10 + $0x18] sm:$0xff]
        %v752 = vld [vmem:[#allocation11] sm:$0xff]
        %v753 = vld [vmem:[#allocation11 + $0x8] sm:$0xff]
        %v754 = vld [vmem:[#allocation11 + $0x10] sm:$0xff]
        %v755 = vld [vmem:[#allocation11 + $0x18] sm:$0xff]
        %757 = vset.pattern.permute.xlu0 0
        %758 = vperm.xlu0 %757, %v752
        %v759 = vpop.permute.xlu0 %758
        %762 = vset.pattern.permute.xlu0 0
        %763 = vperm.xlu0 %762, %v753
        %v764 = vpop.permute.xlu0 %763
        %767 = vset.pattern.permute.xlu0 0
        %768 = vperm.xlu0 %767, %v754
        %v769 = vpop.permute.xlu0 %768
        %772 = vset.pattern.permute.xlu0 0
        %773 = vperm.xlu0 %772, %v755
        %v774 = vpop.permute.xlu0 %773
        %v777 = vsel %vm669, %v748, 0
        %v780 = vsel %vm669, %v749, 0
        %v783 = vsel %vm669, %v750, 0
        %v786 = vsel %vm669, %v751, 0
        %788 = vmatpush.msra.mxu0 0.0
        %789 = vmatpush.msra.mxu0 0.0
        %790 = vmatpush.msra.mxu0 0.0
        %791 = vmatpush.msra.mxu0 0.0
        %792 = vmatpush.msra.mxu0 0.0
        %793 = vmatpush.msra.mxu0 0.0
        %794 = vmatpush.msra.mxu0 0.0
        %795 = vmatpush.msra.mxu0 0.0
        %796 = vmatpush.msra.mxu0 0.0
        %797 = vmatpush.msra.mxu0 0.0
        %798 = vmatpush.msra.mxu0 0.0
        %799 = vmatpush.msra.mxu0 0.0
        %800 = vmatpush.msra.mxu0 %v746
        %801 = vmatpush.msra.mxu0 %v744
        %802 = vmatpush.msra.mxu0 %v742
        %803 = vmatpush.msra.mxu0 %v740
        %804 = vmatmul.f32.gmra.mxu0 %v777
        %v805 = vpop.f32.mrf.mxu0
        %v806 = vadd.f32 %v759, %v805
        %807 = vmatmul.f32.gmra.mxu0 %v780
        %v808 = vpop.f32.mrf.mxu0
        %v809 = vadd.f32 %v764, %v808
        %810 = vmatmul.f32.gmra.mxu0 %v783
        %v811 = vpop.f32.mrf.mxu0
        %v812 = vadd.f32 %v769, %v811
        %813 = vmatmul.f32.gmra.mxu0 %v786
        %v814 = vpop.f32.mrf.mxu0
        %v815 = vadd.f32 %v774, %v814
        %816 = vdwg.mxu0
        %817 = vmatpush.msra.mxu0 0.0
        %818 = vmatpush.msra.mxu0 0.0
        %819 = vmatpush.msra.mxu0 0.0
        %820 = vmatpush.msra.mxu0 0.0
        %821 = vmatpush.msra.mxu0 0.0
        %822 = vmatpush.msra.mxu0 0.0
        %823 = vmatpush.msra.mxu0 0.0
        %824 = vmatpush.msra.mxu0 0.0
        %825 = vmatpush.msra.mxu0 0.0
        %826 = vmatpush.msra.mxu0 0.0
        %827 = vmatpush.msra.mxu0 0.0
        %828 = vmatpush.msra.mxu0 0.0
        %829 = vmatpush.msra.mxu0 %v747
        %830 = vmatpush.msra.mxu0 %v745
        %831 = vmatpush.msra.mxu0 %v743
        %832 = vmatpush.msra.mxu0 %v741
        %833 = vmatmul.f32.gmra.mxu0 %v777
        %v834 = vpop.f32.mrf.mxu0
        %v835 = vadd.f32 %v759, %v834
        %836 = vmatmul.f32.gmra.mxu0 %v780
        %v837 = vpop.f32.mrf.mxu0
        %v838 = vadd.f32 %v764, %v837
        %839 = vmatmul.f32.gmra.mxu0 %v783
        %v840 = vpop.f32.mrf.mxu0
        %v841 = vadd.f32 %v769, %v840
        %842 = vmatmul.f32.gmra.mxu0 %v786
        %v843 = vpop.f32.mrf.mxu0
        %v844 = vadd.f32 %v774, %v843
        %845 = vdwg.mxu0
        %v846 = vtanh.pop %v806
        %v847 = vtanh.pop %v835
        %v848 = vtanh.pop %v809
        %v849 = vtanh.pop %v838
        %v850 = vtanh.pop %v812
        %v851 = vtanh.pop %v841
        %v852 = vtanh.pop %v815
        %v853 = vtanh.pop %v844
        %v854 = vld [vmem:[#allocation13] sm:$0xff]
        %v855 = vld [vmem:[#allocation13 + $0x8] sm:$0xff]
        %v856 = vld [vmem:[#allocation13 + $0x10] sm:$0xff]
        %v857 = vld [vmem:[#allocation13 + $0x18] sm:$0xff]
        %v858 = vld [vmem:[#allocation14] sm:$0xff]
        %v859 = vld [vmem:[#allocation14 + $0x8] sm:$0xff]
        %v860 = vld [vmem:[#allocation14 + $0x10] sm:$0xff]
        %v861 = vld [vmem:[#allocation14 + $0x18] sm:$0xff]
        %863 = vset.pattern.permute.xlu0 0
        %864 = vperm.xlu0 %863, %v858
        %v865 = vpop.permute.xlu0 %864
        %868 = vset.pattern.permute.xlu0 0
        %869 = vperm.xlu0 %868, %v859
        %v870 = vpop.permute.xlu0 %869
        %873 = vset.pattern.permute.xlu0 0
        %874 = vperm.xlu0 %873, %v860
        %v875 = vpop.permute.xlu0 %874
        %878 = vset.pattern.permute.xlu0 0
        %879 = vperm.xlu0 %878, %v861
        %v880 = vpop.permute.xlu0 %879
        %v883 = vsel %vm669, %v854, 0
        %v886 = vsel %vm669, %v855, 0
        %v889 = vsel %vm669, %v856, 0
        %v892 = vsel %vm669, %v857, 0
        %894 = vmatpush.msra.mxu0 0.0
        %895 = vmatpush.msra.mxu0 0.0
        %896 = vmatpush.msra.mxu0 0.0
        %897 = vmatpush.msra.mxu0 0.0
        %898 = vmatpush.msra.mxu0 0.0
        %899 = vmatpush.msra.mxu0 0.0
        %900 = vmatpush.msra.mxu0 0.0
        %901 = vmatpush.msra.mxu0 0.0
        %902 = vmatpush.msra.mxu0 0.0
        %903 = vmatpush.msra.mxu0 0.0
        %904 = vmatpush.msra.mxu0 0.0
        %905 = vmatpush.msra.mxu0 0.0
        %906 = vmatpush.msra.mxu0 %v852
        %907 = vmatpush.msra.mxu0 %v850
        %908 = vmatpush.msra.mxu0 %v848
        %909 = vmatpush.msra.mxu0 %v846
        %910 = vmatmul.f32.gmra.mxu0 %v883
        %v911 = vpop.f32.mrf.mxu0
        %v912 = vadd.f32 %v865, %v911
        %913 = vmatmul.f32.gmra.mxu0 %v886
        %v914 = vpop.f32.mrf.mxu0
        %v915 = vadd.f32 %v870, %v914
        %916 = vmatmul.f32.gmra.mxu0 %v889
        %v917 = vpop.f32.mrf.mxu0
        %v918 = vadd.f32 %v875, %v917
        %919 = vmatmul.f32.gmra.mxu0 %v892
        %v920 = vpop.f32.mrf.mxu0
        %v921 = vadd.f32 %v880, %v920
        %922 = vdwg.mxu0
        %923 = vmatpush.msra.mxu0 0.0
        %924 = vmatpush.msra.mxu0 0.0
        %925 = vmatpush.msra.mxu0 0.0
        %926 = vmatpush.msra.mxu0 0.0
        %927 = vmatpush.msra.mxu0 0.0
        %928 = vmatpush.msra.mxu0 0.0
        %929 = vmatpush.msra.mxu0 0.0
        %930 = vmatpush.msra.mxu0 0.0
        %931 = vmatpush.msra.mxu0 0.0
        %932 = vmatpush.msra.mxu0 0.0
        %933 = vmatpush.msra.mxu0 0.0
        %934 = vmatpush.msra.mxu0 0.0
        %935 = vmatpush.msra.mxu0 %v853
        %936 = vmatpush.msra.mxu0 %v851
        %937 = vmatpush.msra.mxu0 %v849
        %938 = vmatpush.msra.mxu0 %v847
        %939 = vmatmul.f32.gmra.mxu0 %v883
        %v940 = vpop.f32.mrf.mxu0
        %v941 = vadd.f32 %v865, %v940
        %942 = vmatmul.f32.gmra.mxu0 %v886
        %v943 = vpop.f32.mrf.mxu0
        %v944 = vadd.f32 %v870, %v943
        %945 = vmatmul.f32.gmra.mxu0 %v889
        %v946 = vpop.f32.mrf.mxu0
        %v947 = vadd.f32 %v875, %v946
        %948 = vmatmul.f32.gmra.mxu0 %v892
        %v949 = vpop.f32.mrf.mxu0
        %v950 = vadd.f32 %v880, %v949
        %951 = vdwg.mxu0
        %v952 = vtanh.pop %v912
        %v953 = vtanh.pop %v941
        %v954 = vtanh.pop %v915
        %v955 = vtanh.pop %v944
        %v956 = vtanh.pop %v918
        %v957 = vtanh.pop %v947
        %v958 = vtanh.pop %v921
        %v959 = vtanh.pop %v950
        %v960 = vld [vmem:[%s9] sm:$0x1]
        %v961 = vld [vmem:[#allocation2] sm:$0x1]
        %963 = vset.pattern.permute.xlu0 0
        %964 = vperm.xlu0 %963, %v961
        %v965 = vpop.permute.xlu0 %964
        %v967 = vperm.slane %v965, 0
        %v969 = vsel %vm669, %v960, 0
        %971 = vmatpush.msra.mxu0 0.0
        %972 = vmatpush.msra.mxu0 0.0
        %973 = vmatpush.msra.mxu0 0.0
        %974 = vmatpush.msra.mxu0 0.0
        %975 = vmatpush.msra.mxu0 0.0
        %976 = vmatpush.msra.mxu0 0.0
        %977 = vmatpush.msra.mxu0 0.0
        %978 = vmatpush.msra.mxu0 0.0
        %979 = vmatpush.msra.mxu0 0.0
        %980 = vmatpush.msra.mxu0 0.0
        %981 = vmatpush.msra.mxu0 0.0
        %982 = vmatpush.msra.mxu0 0.0
        %983 = vmatpush.msra.mxu0 %v958
        %984 = vmatpush.msra.mxu0 %v956
        %985 = vmatpush.msra.mxu0 %v954
        %986 = vmatpush.msra.mxu0 %v952
        %987 = vmatmul.f32.gmra.mxu0 %v969
        %v988 = vpop.f32.mrf.mxu0
        %v989 = vadd.f32 %v967, %v988
        %990 = vdwg.mxu0
        %991 = vmatpush.msra.mxu0 0.0
        %992 = vmatpush.msra.mxu0 0.0
        %993 = vmatpush.msra.mxu0 0.0
        %994 = vmatpush.msra.mxu0 0.0
        %995 = vmatpush.msra.mxu0 0.0
        %996 = vmatpush.msra.mxu0 0.0
        %997 = vmatpush.msra.mxu0 0.0
        %998 = vmatpush.msra.mxu0 0.0
        %999 = vmatpush.msra.mxu0 0.0
        %1000 = vmatpush.msra.mxu0 0.0
        %1001 = vmatpush.msra.mxu0 0.0
        %1002 = vmatpush.msra.mxu0 0.0
        %1003 = vmatpush.msra.mxu0 %v959
        %1004 = vmatpush.msra.mxu0 %v957
        %1005 = vmatpush.msra.mxu0 %v955
        %1006 = vmatpush.msra.mxu0 %v953
        %1007 = vmatmul.f32.gmra.mxu0 %v969
        %v1008 = vpop.f32.mrf.mxu0
        %v1009 = vadd.f32 %v967, %v1008
        %1010 = vdwg.mxu0
        %v1013 = vrot.slane %v1009, 7
        %vm1014 = vcmask 1040384
        %v1015 = vsel %vm1014, %v989, %v1013
        %v1017 = vlaneseq
        %vm1018 = vcmp.ge.s32.totalorder %v1017, 0
        %vm1019 = vcmp.lt.s32.totalorder %v1017, 256
        %vm1020 = vmand %vm1018, %vm1019
        %1021 = vst.msk [vmem:[%s521] sm:$0x3] %vm1020, %v1015
        %s1022 = smul.u32 2, %s29
        %p1023 = scmp.lt.s32.totalorder %s1022, 3
        %s1024 = scalar_select %p1023, %s1022, 3
        %s1025 = scalar_lea.vmem %s11, %s1024
        // Predicated region
        $region97: #{forward.1} parent=63 // pred_check
          %p1026 = pneg %p283
        $region98: #{forward.1} parent=63 // pred_check_branch
          %1028 = sbr.rel (%p1026) target = $region100
        $region99: #{forward.1} parent=63 // pred_region
          %s1029 = smul.u32 2, %s29
        $region100: #{forward.1} parent=63 // pred_fallthru
          _
      $region64: #{forward.1} parent=5 // pred_fallthru
        _
      %p1030 = scmp.le.s32.totalorder 2, %s24
      // Predicated region
      $region101: #{forward.1} parent=5 // pred_check
        %p1031 = pneg %p1030
      $region102: #{forward.1} parent=5 // pred_check_branch
        %1033 = sbr.rel (%p1031) target = $region104
      $region103: #{forward.1} parent=5 // pred_region
        %s1034 = ssub.s32 %s24, 2
        // Predicated region
        $region105: #{forward.1} parent=103 // pred_check
          %p1035 = pneg %p289
        $region106: #{forward.1} parent=103 // pred_check_branch
          %1037 = sbr.rel (%p1035) target = $region108
        $region107: #{forward.1} parent=103 // pred_region
          %s1038 = smul.u32 2, %s30
          %p1039 = scmp.lt.s32.totalorder %s1038, 3
          %s1040 = scalar_select %p1039, %s1038, 3
          %s1041 = scalar_lea.vmem %s11, %s1040
        $region108: #{forward.1} parent=103 // pred_fallthru
          _
      $region104: #{forward.1} parent=5 // pred_fallthru
        _
    $region6: #{forward.1} parent=1 // loop_footer
      %s28 = sadd.s32 1, %s24
    $region7: #{forward.1} parent=1 // loop_footer_branch
      %23 = sbr.rel target = $region3
    $region8: #{forward.1} parent=1 // loop_exit
      _
    %1042 = vsyncpa [#allocation4], 1
    %s1043 = scalar_lea.sflag [#allocation4], 1
    %1044 = vsyncpa %s1043, 1
    %1045 = vsyncpa [#allocation6], 1
    %1046 = vsyncpa [#allocation9], 1
    %1047 = vsyncpa [#allocation12], 1
    %1048 = vsyncpa [#allocation15], 1

</llo_original>
